<compile_context>
chip_gen: v5e
topology: v5e:2x2
jax: 0.10.0
libtpu: 0.0.40
codegen_flags: <defaults>
</compile_context>

<pallas_src>
import math
import functools

import jax
import jax.numpy as jnp
from jax import lax
from jax.experimental import pallas as pl
from jax.experimental.pallas import tpu as pltpu


_MASK_VALUE = -1e30  # finite large-negative (safe for pure-causal masking in f32)


def _tile(n, cap):
    """Largest power-of-two-ish tile <= cap that divides n (or the full dim)."""
    if n <= cap:
        return n
    t = cap
    while t > 8 and n % t:
        t //= 2
    return t if n % t == 0 else n


# --------------------------- tiled linear (x @ W.T) ---------------------------

def _linear_kernel(x_ref, w_ref, o_ref, acc_ref):
    @pl.when(pl.program_id(2) == 0)
    def _():
        acc_ref[...] = jnp.zeros_like(acc_ref)

    # x: (tm, tk), w: (tn, tk) -> contract last dims (x @ w.T), f32 accumulation on MXU.
    acc_ref[...] += lax.dot_general(
        x_ref[...], w_ref[...], (((1,), (1,)), ((), ())),
        preferred_element_type=jnp.float32)

    @pl.when(pl.program_id(2) == pl.num_programs(2) - 1)
    def _():
        o_ref[...] = acc_ref[...].astype(o_ref.dtype)


def pallas_linear(x, w, *, tm_cap=256, tn_cap=256, tk_cap=512):
    """y = x @ w.T ; x: [M, K], w (PyTorch layout): [N, K] -> y: [M, N]."""
    M, K = x.shape
    N, K2 = w.shape
    assert K == K2
    tm, tn, tk = _tile(M, tm_cap), _tile(N, tn_cap), _tile(K, tk_cap)
    return pl.pallas_call(
        _linear_kernel,
        out_shape=jax.ShapeDtypeStruct((M, N), x.dtype),
        grid=(M // tm, N // tn, K // tk),
        in_specs=[
            pl.BlockSpec((tm, tk), lambda i, j, kk: (i, kk)),
            pl.BlockSpec((tn, tk), lambda i, j, kk: (j, kk)),
        ],
        out_specs=pl.BlockSpec((tm, tn), lambda i, j, kk: (i, j)),
        scratch_shapes=[pltpu.VMEM((tm, tn), jnp.float32)],
        compiler_params=pltpu.CompilerParams(
            dimension_semantics=("parallel", "parallel", "arbitrary")),
    )(x, w)


# ------------------------- flash attention (GQA, causal) -------------------------

def _flash_attn_kernel(q_ref, k_ref, v_ref, o_ref, m_sc, l_sc, acc_sc, *,
                       scale, causal, tq, tk):
    qi = pl.program_id(2)
    ki = pl.program_id(3)

    @pl.when(ki == 0)
    def _():
        m_sc[...] = jnp.full_like(m_sc, _MASK_VALUE)
        l_sc[...] = jnp.zeros_like(l_sc)
        acc_sc[...] = jnp.zeros_like(acc_sc)

    def compute():
        q = q_ref[0, 0] * scale                       # scale folded into q (tq, hd)
        k = k_ref[0, 0]                               # (tk, hd)
        v = v_ref[0, 0]                               # (tk, hd)

        # QK^T without an explicit transpose: contract the head dims.
        s = lax.dot_general(q, k, (((1,), (1,)), ((), ())),
                            preferred_element_type=jnp.float32)   # (tq, tk) f32

        if causal:
            row = qi * tq + lax.broadcasted_iota(jnp.int32, (tq, tk), 0)
            col = ki * tk + lax.broadcasted_iota(jnp.int32, (tq, tk), 1)
            s = jnp.where(row >= col, s, _MASK_VALUE)

        m_prev = m_sc[...]
        m_new = jnp.maximum(m_prev, jnp.max(s, axis=-1, keepdims=True))
        alpha = jnp.exp(m_prev - m_new)
        p = jnp.exp(s - m_new)                        # f32 softmax math
        l_sc[...] = alpha * l_sc[...] + jnp.sum(p, axis=-1, keepdims=True)
        acc_sc[...] = alpha * acc_sc[...] + lax.dot_general(
            p.astype(v.dtype), v, (((1,), (0,)), ((), ())),
            preferred_element_type=jnp.float32)
        m_sc[...] = m_new

    if causal:
        # Skip KV tiles that lie entirely above the causal diagonal.
        q_end = qi * tq + (tq - 1)
        pl.when(ki * tk <= q_end)(compute)
    else:
        compute()

    @pl.when(ki == pl.num_programs(3) - 1)
    def _():
        inv_l = pl.reciprocal(l_sc[...], approx=True)
        o_ref[0, 0] = (acc_sc[...] * inv_l).astype(o_ref.dtype)


def pallas_flash_attention(q, k, v, *, causal=True, tq_cap=128, tk_cap=128):
    """q: [B, H, T, hd]; k, v: [B, G, S, hd] (G query groups) -> [B, H, T, hd]."""
    B, H, T, hd = q.shape
    _, G, S, _ = k.shape
    assert H % G == 0
    heads_per_group = H // G
    scale = 1.0 / math.sqrt(hd)

    tq = _tile(T, tq_cap)
    tk = _tile(S, tk_cap)
    nq, nk = T // tq, S // tk

    def q_map(b, h, qi, ki):
        return (b, h, qi, 0)

    def o_map(b, h, qi, ki):
        return (b, h, qi, 0)

    def kv_map(b, h, qi, ki):
        g = h // heads_per_group                      # GQA sharing via index_map
        if causal and nk > 1:
            # Clamp skipped (fully-masked) tiles to the last visible block so the
            # pipeline does not DMA dead K/V tiles.
            ki = jnp.minimum(ki, (qi * tq + tq - 1) // tk)
        return (b, g, ki, 0)

    kernel = functools.partial(_flash_attn_kernel, scale=scale, causal=causal,
                               tq=tq, tk=tk)
    return pl.pallas_call(
        kernel,
        out_shape=jax.ShapeDtypeStruct((B, H, T, hd), q.dtype),
        grid=(B, H, nq, nk),
        in_specs=[
            pl.BlockSpec((1, 1, tq, hd), q_map),
            pl.BlockSpec((1, 1, tk, hd), kv_map),
            pl.BlockSpec((1, 1, tk, hd), kv_map),
        ],
        out_specs=pl.BlockSpec((1, 1, tq, hd), o_map),
        scratch_shapes=[
            pltpu.VMEM((tq, 1), jnp.float32),    # m (running max)
            pltpu.VMEM((tq, 1), jnp.float32),    # l (running denom)
            pltpu.VMEM((tq, hd), jnp.float32),   # acc (unnormalized output)
        ],
        compiler_params=pltpu.CompilerParams(
            dimension_semantics=("parallel", "parallel", "parallel", "arbitrary")),
    )(q, k, v)


# ------------------------------- JAX glue ----------------------------------

def apply_rope(x, cos, sin):
    """x: [B, T, H, hd]; cos/sin: [T, hd//2]. Interleaved convention (RoPE._apply_rope)."""
    B, T, H, hd = x.shape
    xp = x.reshape(B, T, H, hd // 2, 2)
    x1, x2 = xp[..., 0], xp[..., 1]
    c = cos[None, :, None, :]
    s = sin[None, :, None, :]
    r1 = x1 * c - x2 * s
    r2 = x1 * s + x2 * c
    return jnp.stack([r1, r2], axis=-1).reshape(B, T, H, hd)


def _rope_tables(T, head_dim, theta, dtype):
    pos = jnp.arange(T, dtype=jnp.float32)
    inv_freq = 1.0 / (theta ** (jnp.arange(0, head_dim, 2, dtype=jnp.float32) / head_dim))
    freqs = jnp.outer(pos, inv_freq)
    return jnp.cos(freqs).astype(dtype), jnp.sin(freqs).astype(dtype)


def attention_forward(x, w_qkv, w_o, *, num_heads, query_groups, theta, causal=True):
    """Forward pass of Attention (no padding mask, no KV cache, use_cache=False)."""
    B, T, D = x.shape
    head_dim = D // num_heads

    # QKV projection (tiled Pallas matmul; weights kept in PyTorch [out, in] layout).
    qkv = pallas_linear(x.reshape(B * T, D), w_qkv).reshape(B, T, -1)
    q, k, v = jnp.split(
        qkv, [num_heads * head_dim, num_heads * head_dim + query_groups * head_dim],
        axis=-1)
    q = q.reshape(B, T, num_heads, head_dim)
    k = k.reshape(B, T, query_groups, head_dim)
    v = v.reshape(B, T, query_groups, head_dim)

    # RoPE (applied to q and k, before attention).
    cos, sin = _rope_tables(T, head_dim, theta, x.dtype)
    q = apply_rope(q, cos, sin)
    k = apply_rope(k, cos, sin)

    # [B, T, H, hd] -> [B, H, T, hd] (K/V keep only `query_groups` heads; GQA expansion
    # happens inside the kernel via the index_map, no jnp.repeat / extra HBM traffic).
    qh = q.transpose(0, 2, 1, 3)
    kh = k.transpose(0, 2, 1, 3)
    vh = v.transpose(0, 2, 1, 3)

    out = pallas_flash_attention(qh, kh, vh, causal=causal)     # [B, H, T, hd]
    out = out.transpose(0, 2, 1, 3).reshape(B, T, D)

    # Output projection.
    y = pallas_linear(out.reshape(B * T, D), w_o).reshape(B, T, D)
    return y, None  # use_cache=False -> cache_out is None


# ----------------------------- pure-JAX reference -----------------------------

def reference_forward(x, w_qkv, w_o, *, num_heads, query_groups, theta, causal=True):
    B, T, D = x.shape
    hd = D // num_heads
    qkv = x @ w_qkv.T
    q, k, v = jnp.split(qkv, [num_heads * hd, num_heads * hd + query_groups * hd], axis=-1)
    q = q.reshape(B, T, num_heads, hd)
    k = k.reshape(B, T, query_groups, hd)
    v = v.reshape(B, T, query_groups, hd)
    cos, sin = _rope_tables(T, hd, theta, x.dtype)
    q = apply_rope(q, cos, sin)
    k = apply_rope(k, cos, sin)
    hpg = num_heads // query_groups
    k = jnp.repeat(k, hpg, axis=2)
    v = jnp.repeat(v, hpg, axis=2)
    qh, kh, vh = (t.transpose(0, 2, 1, 3) for t in (q, k, v))
    s = jnp.einsum('bhqd,bhkd->bhqk', qh, kh) / math.sqrt(hd)
    if causal:
        mask = jnp.tril(jnp.ones((T, T), dtype=bool))
        s = jnp.where(mask[None, None], s, _MASK_VALUE)
    p = jax.nn.softmax(s, axis=-1)
    o = jnp.einsum('bhqk,bhkd->bhqd', p, vh)
    o = o.transpose(0, 2, 1, 3).reshape(B, T, D)
    return o @ w_o.T


# --------------------------------- main -------------------------------------

if __name__ == "__main__":
    B, T = 2, 8
    d_model, num_heads, query_groups = 32, 4, 2
    theta = 10000.0
    head_dim = d_model // num_heads
    qkv_out = num_heads * head_dim + 2 * query_groups * head_dim

    key = jax.random.PRNGKey(0)
    kx, kqkv, ko = jax.random.split(key, 3)

    # nn.Linear-style init: U(-1/sqrt(in), 1/sqrt(in)), stored [out, in].
    bound = 1.0 / math.sqrt(d_model)
    w_qkv = jax.random.uniform(kqkv, (qkv_out, d_model), jnp.float32,
                               minval=-bound, maxval=bound)
    w_o = jax.random.uniform(ko, (d_model, d_model), jnp.float32,
                             minval=-bound, maxval=bound)
    x = jax.random.normal(kx, (B, T, d_model), dtype=jnp.float32)

    y, cache = attention_forward(x, w_qkv, w_o,
                                 num_heads=num_heads,
                                 query_groups=query_groups,
                                 theta=theta,
                                 causal=True)
    y = jax.block_until_ready(y)
    assert y.shape == (B, T, d_model)
    assert bool(jnp.all(jnp.isfinite(y)))

    y_ref = reference_forward(x, w_qkv, w_o,
                              num_heads=num_heads,
                              query_groups=query_groups,
                              theta=theta,
                              causal=True)
    assert bool(jnp.allclose(y, y_ref, rtol=2e-2, atol=2e-3)), "mismatch vs JAX reference"

    print("KERNEL_OK")
</pallas_src>

<mosaic_0001>
module attributes {stable_mosaic.version = 11 : i64} {
  func.func @_linear_kernel(%arg0: i32, %arg1: i32, %arg2: i32, %arg3: memref<16x32xf32, #tpu.memory_space<vmem>>, %arg4: memref<64x32xf32, #tpu.memory_space<vmem>>, %arg5: memref<16x64xf32, #tpu.memory_space<vmem>>, %arg6: memref<16x64xf32, #tpu.memory_space<vmem>>) attributes {dimension_semantics = [#tpu.dimension_semantics<parallel>, #tpu.dimension_semantics<parallel>, #tpu.dimension_semantics<arbitrary>], iteration_bounds = array<i64: 1, 1, 1>, scalar_prefetch = 0 : i64, scratch_operands = 1 : i64, tpu.core_type = #tpu.core_type<tc>, window_params = [{transform_indices = @transform_0, window_bounds = array<i64: 16, 32>}, {transform_indices = @transform_1, window_bounds = array<i64: 64, 32>}, {transform_indices = @transform_2, window_bounds = array<i64: 16, 64>}]} {
    %c0_i32 = arith.constant 0 : i32
    %0 = arith.cmpi eq, %arg2, %c0_i32 : i32
    %1 = arith.extui %0 : i1 to i32
    %c0_i32_0 = arith.constant 0 : i32
    %2 = arith.cmpi ne, %1, %c0_i32_0 : i32
    scf.if %2 {
      %cst_10 = arith.constant 0.000000e+00 : f32
      %12 = vector.broadcast %cst_10 : f32 to vector<16x64xf32>
      %c0_11 = arith.constant 0 : index
      %c0_12 = arith.constant 0 : index
      %13 = vector.load %arg6[%c0_11, %c0_12] : memref<16x64xf32, #tpu.memory_space<vmem>>, vector<16x64xf32>
      tpu.vector_store %arg6[%c0_11, %c0_12], %12 {strides = array<i32>} : memref<16x64xf32, #tpu.memory_space<vmem>>, vector<16x64xf32>,
    } else {
    }
    %c0 = arith.constant 0 : index
    %c0_1 = arith.constant 0 : index
    %3 = vector.load %arg6[%c0, %c0_1] : memref<16x64xf32, #tpu.memory_space<vmem>>, vector<16x64xf32>
    %c0_2 = arith.constant 0 : index
    %c0_3 = arith.constant 0 : index
    %4 = vector.load %arg3[%c0_2, %c0_3] : memref<16x32xf32, #tpu.memory_space<vmem>>, vector<16x32xf32>
    %c0_4 = arith.constant 0 : index
    %c0_5 = arith.constant 0 : index
    %5 = vector.load %arg4[%c0_4, %c0_5] : memref<64x32xf32, #tpu.memory_space<vmem>>, vector<64x32xf32>
    %cst = arith.constant dense<0.000000e+00> : vector<16x64xf32>
    %6 = tpu.matmul %4, %5, %cst {dimension_numbers = #tpu.dot_dimension_numbers<[1], [1], [0], [0], [0, 0, 1, 0], [], []>} : vector<16x32xf32>, vector<64x32xf32>, vector<16x64xf32> -> vector<16x64xf32>
    %7 = arith.addf %3, %6 : vector<16x64xf32>
    %c0_6 = arith.constant 0 : index
    %c0_7 = arith.constant 0 : index
    %8 = vector.load %arg6[%c0_6, %c0_7] : memref<16x64xf32, #tpu.memory_space<vmem>>, vector<16x64xf32>
    tpu.vector_store %arg6[%c0_6, %c0_7], %7 {strides = array<i32>} : memref<16x64xf32, #tpu.memory_space<vmem>>, vector<16x64xf32>,
    %c0_i32_8 = arith.constant 0 : i32
    %9 = arith.cmpi eq, %arg2, %c0_i32_8 : i32
    %10 = arith.extui %9 : i1 to i32
    %c0_i32_9 = arith.constant 0 : i32
    %11 = arith.cmpi ne, %10, %c0_i32_9 : i32
    scf.if %11 {
      %c0_10 = arith.constant 0 : index
      %c0_11 = arith.constant 0 : index
      %12 = vector.load %arg6[%c0_10, %c0_11] : memref<16x64xf32, #tpu.memory_space<vmem>>, vector<16x64xf32>
      %c0_12 = arith.constant 0 : index
      %c0_13 = arith.constant 0 : index
      %13 = vector.load %arg5[%c0_12, %c0_13] : memref<16x64xf32, #tpu.memory_space<vmem>>, vector<16x64xf32>
      tpu.vector_store %arg5[%c0_12, %c0_13], %12 {strides = array<i32>} : memref<16x64xf32, #tpu.memory_space<vmem>>, vector<16x64xf32>,
    } else {
    }
    return
  }
  func.func @transform_0(%arg0: i32, %arg1: i32, %arg2: i32) -> (i32, i32) {
    %c0_i32 = arith.constant 0 : i32
    return %arg0, %arg2 : i32, i32
  }
  func.func @transform_1(%arg0: i32, %arg1: i32, %arg2: i32) -> (i32, i32) {
    %c0_i32 = arith.constant 0 : i32
    return %arg1, %arg2 : i32, i32
  }
  func.func @transform_2(%arg0: i32, %arg1: i32, %arg2: i32) -> (i32, i32) {
    %c0_i32 = arith.constant 0 : i32
    return %arg0, %arg1 : i32, i32
  }
}

</mosaic_0001>

<llo_original>
// kernel: tpu_custom_call.1
$region0: #{tpu_custom_call.1}
  #allocation0 [shape = 'u32[]', space=smem, size = 0x4, offset = 0x4, fixed_abs, tag = 'smem constant byte address 0x4 - core index']
  #allocation1 [shape = 'u32[72,128]{1,0:T(1,128)}', space=vmem, size = 0x9000, scoped, tag = 'internal scratch']
  #allocation2 [shape = 'f32[16,64]{1,0:T(8,128)}', space=vmem, size = 0x2000, scoped, tag = 'scratch operand']
  %s0 = inlined_call_operand.vmem [shape: f32[16,32], index: 0, kind: input, shape index: {}]
  %s1 = inlined_call_operand.vmem [shape: f32[64,32], index: 1, kind: input, shape index: {}]
  %s2 = inlined_call_operand.hbm [shape: f32[16,64], index: 2, kind: output, shape index: {}]
  %s3 = sld [smem:[#allocation0]]
  $region26: #{tpu_custom_call.1} parent=0
    _
  %s5 = ssub.s32 1, %s3
  %s6 = scalar_select 0, %s5, %s3
  $region1: #{tpu_custom_call.1} parent=0
    #allocation3 [shape = 'u8[8192]{0}', space=vmem, size = 0x2000, scoped, tag = 'output window, operand 0, single buffered']
    #allocation4 [shape = 's32[1]{0}', space=sflag, size = 0x4, scoped, tag = 'scoped memory for tpu_custom_call.1']
    %7 = vsyncpa [#allocation4], 0
    // Predicated region
    $region2: #{tpu_custom_call.1} parent=1 // pred_check
      _
    $region3: #{tpu_custom_call.1} parent=1 // pred_check_branch
      %9 = sbr.rel (0) target = $region5
    $region4: #{tpu_custom_call.1} parent=1 // pred_region
      _
    $region5: #{tpu_custom_call.1} parent=1 // pred_fallthru
      _
    // Predicated region
    $region6: #{tpu_custom_call.1} parent=1 // pred_check
      _
    $region7: #{tpu_custom_call.1} parent=1 // pred_check_branch
      %11 = sbr.rel (0) target = $region9
    $region8: #{tpu_custom_call.1} parent=1 // pred_region
      _
    $region9: #{tpu_custom_call.1} parent=1 // pred_fallthru
      _
    %p12 = scmp.eq.s32.totalorder 0, 0
    // Predicated region
    $region10: #{tpu_custom_call.1} parent=1 // pred_check
      %p13 = pneg %p12
    $region11: #{tpu_custom_call.1} parent=1 // pred_check_branch
      %15 = sbr.rel (%p13) target = $region13
    $region12: #{tpu_custom_call.1} parent=1 // pred_region
      %vm16 = vcmask 523264
      %17 = vst.msk [vmem:[#allocation2] sm:$0xff] %vm16, 0.0
      %18 = vst.msk [vmem:[#allocation2 + $0x8] sm:$0xff] %vm16, 0.0
    $region13: #{tpu_custom_call.1} parent=1 // pred_fallthru
      _
    %v19 = vld [vmem:[#allocation2] sm:$0xff]
    %v20 = vld [vmem:[#allocation2 + $0x8] sm:$0xff]
    %v21 = vld [vmem:[%s0] sm:$0xff]
    %v22 = vld [vmem:[%s0 + $0x8] sm:$0xff]
    %v23 = vld [vmem:[%s1] sm:$0xff]
    %v24 = vld [vmem:[%s1 + $0x8] sm:$0xff]
    %v25 = vld [vmem:[%s1 + $0x10] sm:$0xff]
    %v26 = vld [vmem:[%s1 + $0x18] sm:$0xff]
    %v27 = vld [vmem:[%s1 + $0x20] sm:$0xff]
    %v28 = vld [vmem:[%s1 + $0x28] sm:$0xff]
    %v29 = vld [vmem:[%s1 + $0x30] sm:$0xff]
    %v30 = vld [vmem:[%s1 + $0x38] sm:$0xff]
    %vm31 = vcmask 261120
    %v33 = vsel %vm31, %v21, 0
    %v36 = vsel %vm31, %v22, 0
    %v39 = vsel %vm31, %v23, 0
    %v42 = vsel %vm31, %v24, 0
    %v45 = vsel %vm31, %v25, 0
    %v48 = vsel %vm31, %v26, 0
    %v51 = vsel %vm31, %v27, 0
    %v54 = vsel %vm31, %v28, 0
    %v57 = vsel %vm31, %v29, 0
    %v60 = vsel %vm31, %v30, 0
    %62 = vmatpush.xpose.msra.mxu0 0.0
    %63 = vmatpush.xpose.msra.mxu0 0.0
    %64 = vmatpush.xpose.msra.mxu0 0.0
    %65 = vmatpush.xpose.msra.mxu0 0.0
    %66 = vmatpush.xpose.msra.mxu0 0.0
    %67 = vmatpush.xpose.msra.mxu0 0.0
    %68 = vmatpush.xpose.msra.mxu0 0.0
    %69 = vmatpush.xpose.msra.mxu0 0.0
    %70 = vmatpush.xpose.msra.mxu0 %v60
    %71 = vmatpush.xpose.msra.mxu0 %v57
    %72 = vmatpush.xpose.msra.mxu0 %v54
    %73 = vmatpush.xpose.msra.mxu0 %v51
    %74 = vmatpush.xpose.msra.mxu0 %v48
    %75 = vmatpush.xpose.msra.mxu0 %v45
    %76 = vmatpush.xpose.msra.mxu0 %v42
    %77 = vmatpush.xpose.msra.mxu0 %v39
    %78 = vmatmul.f32.gmra.mxu0 %v33
    %v79 = vpop.f32.mrf.mxu0
    %v80 = vadd.f32 0.0, %v79
    %81 = vmatmul.f32.gmra.mxu0 %v36
    %v82 = vpop.f32.mrf.mxu0
    %v83 = vadd.f32 0.0, %v82
    %84 = vdwg.mxu0
    %v85 = vadd.f32 %v19, %v80
    %v86 = vadd.f32 %v20, %v83
    %vm87 = vcmask 523264
    %88 = vst.msk [vmem:[#allocation2] sm:$0xff] %vm87, %v85
    %89 = vst.msk [vmem:[#allocation2 + $0x8] sm:$0xff] %vm87, %v86
    // Predicated region
    $region14: #{tpu_custom_call.1} parent=1 // pred_check
      %p90 = pneg %p12
    $region15: #{tpu_custom_call.1} parent=1 // pred_check_branch
      %92 = sbr.rel (%p90) target = $region17
    $region16: #{tpu_custom_call.1} parent=1 // pred_region
      %v93 = vld [vmem:[#allocation2] sm:$0xff]
      %v94 = vld [vmem:[#allocation2 + $0x8] sm:$0xff]
      %95 = vst.msk [vmem:[#allocation3] sm:$0xff] %vm87, %v93
      %96 = vst.msk [vmem:[#allocation3 + $0x8] sm:$0xff] %vm87, %v94
    $region17: #{tpu_custom_call.1} parent=1 // pred_fallthru
      _
    // Predicated region
    $region18: #{tpu_custom_call.1} parent=1 // pred_check
      _
    $region19: #{tpu_custom_call.1} parent=1 // pred_check_branch
      %98 = sbr.rel (0) target = $region21
    $region20: #{tpu_custom_call.1} parent=1 // pred_region
      %100 = vsyncadd [#allocation4], 0
      %s101 = sshll.u32 [#allocation3], 4
      %s102 = int_to_ptr.vmem [resolvable:$true] %s101
      %s103 = sshll.u32 %s2, 4
      %s104 = int_to_ptr.hbm [resolvable:$true] %s103
      %109 = dma.vmem_to_hbm [thread:$0]  %s102, 256, %s104, [#allocation4], 128, 128, 8
    $region21: #{tpu_custom_call.1} parent=1 // pred_fallthru
      _
    // Predicated region
    $region22: #{tpu_custom_call.1} parent=1 // pred_check
      _
    $region23: #{tpu_custom_call.1} parent=1 // pred_check_branch
      %111 = sbr.rel (0) target = $region25
    $region24: #{tpu_custom_call.1} parent=1 // pred_region
      %113 = dma.done [#allocation4], 256
    $region25: #{tpu_custom_call.1} parent=1 // pred_fallthru
      _
    %114 = vsyncpa [#allocation4], 1

</llo_original>
